<compile_context>
chip_gen: v5e
topology: v5e:2x2
jax: 0.10.0
libtpu: 0.0.40
codegen_flags: <defaults>
</compile_context>

<pallas_src>
import jax
import jax.numpy as jnp
from jax.experimental import pallas as pl
from jax.experimental.pallas import tpu as pltpu


# ----------------------------------------------------------------------------
# Packed parameter buffer layout: (128, 64) f32, all row starts 8-aligned.
# ----------------------------------------------------------------------------
_PACKED_SHAPE = (128, 64)

_W1 = (0, 4, 0, 64)      # W1cat: [j, 16*i + o] = w1[o, i, j]
_W2 = (8, 24, 0, 32)     # w2.T  (16, 32)
_W3 = (24, 56, 0, 16)    # w3.T  (32, 16)
_W4 = (56, 72, 0, 4)     # w4.T  (16, 4)
_B1 = (72, 0, 16)        # biases / w5 row / b5: replicated across 8 rows
_B2 = (80, 0, 32)
_B3 = (88, 0, 16)
_B4 = (96, 0, 4)
_W5 = (104, 0, 4)
_B5 = (112, 0, 1)


def network_kernel(x_ref, p_ref, out_ref):
    """x_ref: (3, N, 4) stacked (x0, x1, x2); p_ref: (128, 64) packed params;
    out_ref: (N, 1) fc5 output (the module's (1, 4) is this transposed)."""
    n = out_ref.shape[0]                      # N == 4 (static)

    def w(off):
        r0, r1, c0, c1 = off
        return p_ref[r0:r1, c0:c1]

    def b(off):
        r0, c0, c1 = off
        return p_ref[r0:r0 + n, c0:c1]        # pre-broadcast slab → plain load

    xr = x_ref[1]                             # info[1]             (N, 4)
    # First MXU matmul issues immediately on xr; the VPU add below overlaps.
    m = jnp.dot(xr, w(_W1), preferred_element_type=jnp.float32)       # (N, 64)
    xs = x_ref[0] + x_ref[2]                  # info[0] + info[2]    (N, 4)

    # Bilinear: y1[r, o] = b1[o] + sum_i xs[r, i] * m[r, 16*i + o]    (VPU)
    acc = b(_B1)
    for i in range(4):
        acc = acc + xs[:, i:i + 1] * m[:, 16 * i:16 * (i + 1)]
    y = jnp.tanh(acc)                                                  # (N, 16)

    # MLP tail (fc2..fc4) on the MXU.
    y = jnp.tanh(jnp.dot(y, w(_W2), preferred_element_type=jnp.float32) + b(_B2))  # (N, 32)
    y = jnp.tanh(jnp.dot(y, w(_W3), preferred_element_type=jnp.float32) + b(_B3))  # (N, 16)
    y = jnp.tanh(jnp.dot(y, w(_W4), preferred_element_type=jnp.float32) + b(_B4))  # (N, 4)

    # fc5 on the VPU + a lane reduce (no fifth MXU round trip):
    #   out[r, 0] = b5 + sum_k w5[0, k] * y[r, k]
    out_ref[...] = jnp.sum(y * b(_W5), axis=-1, keepdims=True) + b(_B5)


def pack_params(params):
    """One-time layout prep: pack all weights/biases into one (128, 64) f32
    buffer (1 DMA).  Weights are pre-transposed; biases, the w5 row and b5 are
    pre-broadcast across 8-row, sublane-aligned slabs."""
    (w1, b1), (w2, b2), (w3, b3), (w4, b4), (w5, b5) = params
    p = jnp.zeros(_PACKED_SHAPE, jnp.float32)
    # W1cat[j, 16*i + o] = w1[o, i, j]
    p = p.at[_W1[0]:_W1[1], _W1[2]:_W1[3]].set(
        jnp.transpose(w1, (2, 1, 0)).reshape(4, 64))
    p = p.at[_W2[0]:_W2[1], _W2[2]:_W2[3]].set(w2.T)
    p = p.at[_W3[0]:_W3[1], _W3[2]:_W3[3]].set(w3.T)
    p = p.at[_W4[0]:_W4[1], _W4[2]:_W4[3]].set(w4.T)

    def slab(buf, off, row):
        r0, c0, c1 = off
        return buf.at[r0:r0 + 8, c0:c1].set(jnp.broadcast_to(row, (8, c1 - c0)))

    p = slab(p, _B1, b1)
    p = slab(p, _B2, b2)
    p = slab(p, _B3, b3)
    p = slab(p, _B4, b4)
    p = slab(p, _W5, w5[0])
    p = slab(p, _B5, b5)
    return p


def network_forward(info, packed_params):
    """Module-equivalent forward.  info: (x0, x1, x2), each (4, 4) f32, or an
    already-stacked (3, 4, 4) array (preferred: stack once at the producer).
    Returns (1, 4)."""
    x = jnp.stack(info) if isinstance(info, (tuple, list)) else info
    three, n, f = x.shape
    assert (three, f) == (3, 4) and n == 4, "final reshape((1, 4)) requires N == 4"
    vmem = pl.BlockSpec(memory_space=pltpu.MemorySpace.VMEM)
    out = pl.pallas_call(
        network_kernel,
        out_shape=jax.ShapeDtypeStruct((n, 1), jnp.float32),
        in_specs=[vmem, vmem],
        out_specs=vmem,
    )(x, packed_params)
    return out.reshape(1, n)   # the module's trailing .reshape((1, 4))


def network_forward_batched(x_stacked, packed_params):
    """Evaluate the network for many independent (x0, x1, x2) triples under a
    single pallas_call (amortizes dispatch + DMA; the dominant win here).

    x_stacked: (B, 3, 4, 4) f32.  Returns (B, 4, 1); item b's module output is
    out[b, :, 0].reshape(1, 4).

    The packed-parameter BlockSpec has a constant index_map, so the (128, 64)
    weight buffer is DMA'd once and stays VMEM-resident across the whole grid;
    the batch axis is "parallel" so v7x shards it across its two TensorCores.
    """
    bsz, three, n, f = x_stacked.shape
    assert (three, n, f) == (3, 4, 4)
    # NOTE: for very large B, a lane-dense output packing (batch on the 128
    # lanes) would speed the store path further; (B, 4, 1) is kept for a
    # simple consumer layout.
    return pl.pallas_call(
        network_kernel,
        out_shape=jax.ShapeDtypeStruct((bsz, n, 1), jnp.float32),
        grid=(bsz,),
        in_specs=[
            pl.BlockSpec((pl.Squeezed(), 3, n, 4), lambda b: (b, 0, 0, 0)),
            pl.BlockSpec(_PACKED_SHAPE, lambda b: (0, 0)),   # weights resident
        ],
        out_specs=pl.BlockSpec((pl.Squeezed(), n, 1), lambda b: (b, 0, 0)),
        compiler_params=pltpu.CompilerParams(
            dimension_semantics=("parallel",)),
    )(x_stacked, packed_params)


# ----------------------------------------------------------------------------
# Deterministic parameter init (shapes from Network.__init__) + JAX reference
# ----------------------------------------------------------------------------
def init_params(key):
    def uniform(k, shape, fan_in):
        bound = 1.0 / jnp.sqrt(jnp.float32(fan_in))
        return jax.random.uniform(k, shape, jnp.float32, -bound, bound)

    ks = jax.random.split(key, 10)
    w1 = uniform(ks[0], (16, 4, 4), 4)   # nn.Bilinear(4, 4, 16): (out, in1, in2)
    b1 = uniform(ks[1], (16,), 4)
    w2 = uniform(ks[2], (32, 16), 16)    # nn.Linear(16, 32): (out, in)
    b2 = uniform(ks[3], (32,), 16)
    w3 = uniform(ks[4], (16, 32), 32)
    b3 = uniform(ks[5], (16,), 32)
    w4 = uniform(ks[6], (4, 16), 16)
    b4 = uniform(ks[7], (4,), 16)
    w5 = uniform(ks[8], (1, 4), 4)
    b5 = uniform(ks[9], (1,), 4)
    return ((w1, b1), (w2, b2), (w3, b3), (w4, b4), (w5, b5))


def reference_forward(info, params):
    """Pure-JAX reference mirroring the PyTorch forward (for verification)."""
    x0, x1, x2 = info
    (w1, b1), (w2, b2), (w3, b3), (w4, b4), (w5, b5) = params
    y = jnp.tanh(jnp.einsum('ni,oij,nj->no', x0 + x2, w1, x1) + b1)
    y = jnp.tanh(y @ w2.T + b2)
    y = jnp.tanh(y @ w3.T + b3)
    y = jnp.tanh(y @ w4.T + b4)
    y = y @ w5.T + b5
    return y.reshape(1, 4)


if __name__ == "__main__":
    key = jax.random.PRNGKey(0)
    k_in, k_par, k_bat = jax.random.split(key, 3)
    kx0, kx1, kx2 = jax.random.split(k_in, 3)

    # Batch of 4 samples, 4 features each (the final .reshape((1, 4)) implies N=4).
    x0 = jax.random.normal(kx0, (4, 4), jnp.float32)
    x1 = jax.random.normal(kx1, (4, 4), jnp.float32)
    x2 = jax.random.normal(kx2, (4, 4), jnp.float32)

    params = init_params(k_par)
    packed = pack_params(params)          # one-time layout prep (not per call)

    # --- Single-call path (module-equivalent semantics) ---
    fwd = jax.jit(network_forward)
    out = jax.block_until_ready(fwd((x0, x1, x2), packed))
    ref = reference_forward((x0, x1, x2), params)
    assert out.shape == (1, 4)
    assert jnp.allclose(out, ref, atol=1e-5, rtol=1e-5)

    # --- Batched path: many (x0, x1, x2) triples under one pallas_call ---
    B = 8
    xb = jax.random.normal(k_bat, (B, 3, 4, 4), jnp.float32)
    fwd_b = jax.jit(network_forward_batched)
    out_b = jax.block_until_ready(fwd_b(xb, packed))
    ref_b = jax.vmap(
        lambda t: reference_forward((t[0], t[1], t[2]), params))(xb)   # (B, 1, 4)
    assert out_b.shape == (B, 4, 1)
    assert jnp.allclose(out_b[:, :, 0], ref_b[:, 0, :], atol=1e-5, rtol=1e-5)

    print("KERNEL_OK")
</pallas_src>

<mosaic_0001>
module attributes {stable_mosaic.version = 11 : i64} {
  func.func @network_kernel(%arg0: memref<3x4x4xf32, #tpu.memory_space<vmem>>, %arg1: memref<128x64xf32, #tpu.memory_space<vmem>>, %arg2: memref<4x1xf32, #tpu.memory_space<vmem>>) attributes {dimension_semantics = [], scalar_prefetch = 0 : i64, scratch_operands = 0 : i64, tpu.core_type = #tpu.core_type<tc>} {
    %c1 = arith.constant 1 : index
    %c0 = arith.constant 0 : index
    %c0_0 = arith.constant 0 : index
    %0 = vector.load %arg0[%c1, %c0, %c0_0] : memref<3x4x4xf32, #tpu.memory_space<vmem>>, vector<1x4x4xf32>
    %1 = vector.shape_cast %0 : vector<1x4x4xf32> to vector<4x4xf32>
    %c0_1 = arith.constant 0 : index
    %c0_2 = arith.constant 0 : index
    %2 = vector.load %arg1[%c0_1, %c0_2] : memref<128x64xf32, #tpu.memory_space<vmem>>, vector<4x64xf32>
    %cst = arith.constant dense<0.000000e+00> : vector<4x64xf32>
    %3 = tpu.matmul %1, %2, %cst {dimension_numbers = #tpu.dot_dimension_numbers<[1], [0], [0], [1], [0, 0, 1, 1], [], []>} : vector<4x4xf32>, vector<4x64xf32>, vector<4x64xf32> -> vector<4x64xf32>
    %c0_3 = arith.constant 0 : index
    %c0_4 = arith.constant 0 : index
    %c0_5 = arith.constant 0 : index
    %4 = vector.load %arg0[%c0_3, %c0_4, %c0_5] : memref<3x4x4xf32, #tpu.memory_space<vmem>>, vector<1x4x4xf32>
    %5 = vector.shape_cast %4 : vector<1x4x4xf32> to vector<4x4xf32>
    %c2 = arith.constant 2 : index
    %c0_6 = arith.constant 0 : index
    %c0_7 = arith.constant 0 : index
    %6 = vector.load %arg0[%c2, %c0_6, %c0_7] : memref<3x4x4xf32, #tpu.memory_space<vmem>>, vector<1x4x4xf32>
    %7 = vector.shape_cast %6 : vector<1x4x4xf32> to vector<4x4xf32>
    %8 = arith.addf %5, %7 : vector<4x4xf32>
    %c72 = arith.constant 72 : index
    %c0_8 = arith.constant 0 : index
    %9 = vector.load %arg1[%c72, %c0_8] : memref<128x64xf32, #tpu.memory_space<vmem>>, vector<4x16xf32>
    %10 = vector.extract_strided_slice %8 {offsets = [0, 0], sizes = [4, 1], strides = [1, 1]} : vector<4x4xf32> to vector<4x1xf32>
    %11 = vector.extract_strided_slice %3 {offsets = [0, 0], sizes = [4, 16], strides = [1, 1]} : vector<4x64xf32> to vector<4x16xf32>
    %12 = vector.broadcast %10 : vector<4x1xf32> to vector<4x16xf32>
    %13 = arith.mulf %12, %11 : vector<4x16xf32>
    %14 = arith.addf %9, %13 : vector<4x16xf32>
    %15 = vector.extract_strided_slice %8 {offsets = [0, 1], sizes = [4, 1], strides = [1, 1]} : vector<4x4xf32> to vector<4x1xf32>
    %16 = vector.extract_strided_slice %3 {offsets = [0, 16], sizes = [4, 16], strides = [1, 1]} : vector<4x64xf32> to vector<4x16xf32>
    %17 = vector.broadcast %15 : vector<4x1xf32> to vector<4x16xf32>
    %18 = arith.mulf %17, %16 : vector<4x16xf32>
    %19 = arith.addf %14, %18 : vector<4x16xf32>
    %20 = vector.extract_strided_slice %8 {offsets = [0, 2], sizes = [4, 1], strides = [1, 1]} : vector<4x4xf32> to vector<4x1xf32>
    %21 = vector.extract_strided_slice %3 {offsets = [0, 32], sizes = [4, 16], strides = [1, 1]} : vector<4x64xf32> to vector<4x16xf32>
    %22 = vector.broadcast %20 : vector<4x1xf32> to vector<4x16xf32>
    %23 = arith.mulf %22, %21 : vector<4x16xf32>
    %24 = arith.addf %19, %23 : vector<4x16xf32>
    %25 = vector.extract_strided_slice %8 {offsets = [0, 3], sizes = [4, 1], strides = [1, 1]} : vector<4x4xf32> to vector<4x1xf32>
    %26 = vector.extract_strided_slice %3 {offsets = [0, 48], sizes = [4, 16], strides = [1, 1]} : vector<4x64xf32> to vector<4x16xf32>
    %27 = vector.broadcast %25 : vector<4x1xf32> to vector<4x16xf32>
    %28 = arith.mulf %27, %26 : vector<4x16xf32>
    %29 = arith.addf %24, %28 : vector<4x16xf32>
    %30 = math.tanh %29 : vector<4x16xf32>
    %c8 = arith.constant 8 : index
    %c0_9 = arith.constant 0 : index
    %31 = vector.load %arg1[%c8, %c0_9] : memref<128x64xf32, #tpu.memory_space<vmem>>, vector<16x32xf32>
    %cst_10 = arith.constant dense<0.000000e+00> : vector<4x32xf32>
    %32 = tpu.matmul %30, %31, %cst_10 {dimension_numbers = #tpu.dot_dimension_numbers<[1], [0], [0], [1], [0, 0, 1, 1], [], []>} : vector<4x16xf32>, vector<16x32xf32>, vector<4x32xf32> -> vector<4x32xf32>
    %c80 = arith.constant 80 : index
    %c0_11 = arith.constant 0 : index
    %33 = vector.load %arg1[%c80, %c0_11] : memref<128x64xf32, #tpu.memory_space<vmem>>, vector<4x32xf32>
    %34 = arith.addf %32, %33 : vector<4x32xf32>
    %35 = math.tanh %34 : vector<4x32xf32>
    %c24 = arith.constant 24 : index
    %c0_12 = arith.constant 0 : index
    %36 = vector.load %arg1[%c24, %c0_12] : memref<128x64xf32, #tpu.memory_space<vmem>>, vector<32x16xf32>
    %cst_13 = arith.constant dense<0.000000e+00> : vector<4x16xf32>
    %37 = tpu.matmul %35, %36, %cst_13 {dimension_numbers = #tpu.dot_dimension_numbers<[1], [0], [0], [1], [0, 0, 1, 1], [], []>} : vector<4x32xf32>, vector<32x16xf32>, vector<4x16xf32> -> vector<4x16xf32>
    %c88 = arith.constant 88 : index
    %c0_14 = arith.constant 0 : index
    %38 = vector.load %arg1[%c88, %c0_14] : memref<128x64xf32, #tpu.memory_space<vmem>>, vector<4x16xf32>
    %39 = arith.addf %37, %38 : vector<4x16xf32>
    %40 = math.tanh %39 : vector<4x16xf32>
    %c56 = arith.constant 56 : index
    %c0_15 = arith.constant 0 : index
    %41 = vector.load %arg1[%c56, %c0_15] : memref<128x64xf32, #tpu.memory_space<vmem>>, vector<16x4xf32>
    %cst_16 = arith.constant dense<0.000000e+00> : vector<4x4xf32>
    %42 = tpu.matmul %40, %41, %cst_16 {dimension_numbers = #tpu.dot_dimension_numbers<[1], [0], [0], [1], [0, 0, 1, 1], [], []>} : vector<4x16xf32>, vector<16x4xf32>, vector<4x4xf32> -> vector<4x4xf32>
    %c96 = arith.constant 96 : index
    %c0_17 = arith.constant 0 : index
    %43 = vector.load %arg1[%c96, %c0_17] : memref<128x64xf32, #tpu.memory_space<vmem>>, vector<4x4xf32>
    %44 = arith.addf %42, %43 : vector<4x4xf32>
    %45 = math.tanh %44 : vector<4x4xf32>
    %c104 = arith.constant 104 : index
    %c0_18 = arith.constant 0 : index
    %46 = vector.load %arg1[%c104, %c0_18] : memref<128x64xf32, #tpu.memory_space<vmem>>, vector<4x4xf32>
    %47 = arith.mulf %45, %46 : vector<4x4xf32>
    %cst_19 = arith.constant dense<0.000000e+00> : vector<4xf32>
    %48 = vector.multi_reduction <add>, %47, %cst_19 [1] : vector<4x4xf32> to vector<4xf32>
    %49 = vector.shape_cast %48 : vector<4xf32> to vector<4x1xf32>
    %c112 = arith.constant 112 : index
    %c0_20 = arith.constant 0 : index
    %50 = vector.load %arg1[%c112, %c0_20] : memref<128x64xf32, #tpu.memory_space<vmem>>, vector<4x1xf32>
    %51 = arith.addf %49, %50 : vector<4x1xf32>
    %c0_21 = arith.constant 0 : index
    %c0_22 = arith.constant 0 : index
    %52 = vector.load %arg2[%c0_21, %c0_22] : memref<4x1xf32, #tpu.memory_space<vmem>>, vector<4x1xf32>
    tpu.vector_store %arg2[%c0_21, %c0_22], %51 {strides = array<i32>} : memref<4x1xf32, #tpu.memory_space<vmem>>, vector<4x1xf32>,
    return
  }
}

</mosaic_0001>

<llo_original>
// kernel: network_forward.1
$region0: #{network_forward.1}
  #allocation0 [shape = 'u32[]', space=smem, size = 0x4, offset = 0x4, fixed_abs, tag = 'smem constant byte address 0x4 - core index']
  #allocation1 [shape = 'u32[72,128]{1,0:T(1,128)}', space=vmem, size = 0x9000, scoped, tag = 'internal scratch']
  %s0 = inlined_call_operand.vmem [shape: f32[3,4,4], index: 0, kind: input, shape index: {}]
  %s1 = inlined_call_operand.vmem [shape: f32[128,64], index: 1, kind: input, shape index: {}]
  %s2 = inlined_call_operand.vmem [shape: f32[4,1], index: 2, kind: output, shape index: {}]
  %s3 = sld [smem:[#allocation0]]
  $region18: #{network_forward.1} parent=0
    _
  %s5 = ssub.s32 1, %s3
  %s6 = scalar_select 0, %s5, %s3
  // Predicated region
  $region2: #{network_forward.1} parent=0 // pred_check
    _
  $region3: #{network_forward.1} parent=0 // pred_check_branch
    %8 = sbr.rel (0) target = $region5
  $region4: #{network_forward.1} parent=0 // pred_region
    _
  $region5: #{network_forward.1} parent=0 // pred_fallthru
    _
  // Predicated region
  $region6: #{network_forward.1} parent=0 // pred_check
    _
  $region7: #{network_forward.1} parent=0 // pred_check_branch
    %10 = sbr.rel (0) target = $region9
  $region8: #{network_forward.1} parent=0 // pred_region
    _
  $region9: #{network_forward.1} parent=0 // pred_fallthru
    _
  %s11 = scalar_lea.vmem %s0, 4
  %v12 = vld [vmem:[%s11] sm:$0xf]
  %v13 = vld [vmem:[%s1] sm:$0xf]
  %vm14 = vcmask 31744
  %v16 = vsel %vm14, %v12, 0
  %vm18 = vcmask 1043456
  %v20 = vsel %vm18, %v13, 0
  %22 = vmatpush.msra.mxu0 0.0
  %23 = vmatpush.msra.mxu0 0.0
  %24 = vmatpush.msra.mxu0 0.0
  %25 = vmatpush.msra.mxu0 0.0
  %26 = vmatpush.msra.mxu0 0.0
  %27 = vmatpush.msra.mxu0 0.0
  %28 = vmatpush.msra.mxu0 0.0
  %29 = vmatpush.msra.mxu0 0.0
  %30 = vmatpush.msra.mxu0 0.0
  %31 = vmatpush.msra.mxu0 0.0
  %32 = vmatpush.msra.mxu0 0.0
  %33 = vmatpush.msra.mxu0 0.0
  %34 = vmatpush.msra.mxu0 0.0
  %35 = vmatpush.msra.mxu0 0.0
  %36 = vmatpush.msra.mxu0 0.0
  %37 = vmatpush.msra.mxu0 %v20
  %38 = vmatmul.f32.gmra.mxu0 %v16
  %v39 = vpop.f32.mrf.mxu0
  %v40 = vadd.f32 0.0, %v39
  %41 = vdwg.mxu0
  %v42 = vld [vmem:[%s0] sm:$0xf]
  %s43 = scalar_lea.vmem %s0, 8
  %v44 = vld [vmem:[%s43] sm:$0xf]
  %v45 = vadd.f32 %v42, %v44
  %v46 = vld [vmem:[%s1 + $0x48] sm:$0xf]
  %48 = vset.pattern.permute.xlu0 0
  %49 = vperm.xlu0 %48, %v45
  %v50 = vpop.permute.xlu0 %49
  %v52 = vmul.f32 %v50, %v40
  %v53 = vadd.f32 %v46, %v52
  %54 = vset.pattern.permute.xlu0 1
  %55 = vperm.xlu0 %54, %v45
  %v56 = vpop.permute.xlu0 %55
  %v58 = vmul.f32 %v56, %v40
  %60 = vrot.lane.b32.xlu0 %v58, 112
  %v61 = vpop.permute.xlu0 %60
  %v63 = vadd.f32 %v53, %v61
  %64 = vset.pattern.permute.xlu0 2
  %65 = vperm.xlu0 %64, %v45
  %v66 = vpop.permute.xlu0 %65
  %v68 = vmul.f32 %v66, %v40
  %70 = vrot.lane.b32.xlu0 %v68, 96
  %v71 = vpop.permute.xlu0 %70
  %v73 = vadd.f32 %v63, %v71
  %74 = vset.pattern.permute.xlu0 3
  %75 = vperm.xlu0 %74, %v45
  %v76 = vpop.permute.xlu0 %75
  %v78 = vmul.f32 %v76, %v40
  %80 = vrot.lane.b32.xlu0 %v78, 80
  %v81 = vpop.permute.xlu0 %80
  %v83 = vadd.f32 %v73, %v81
  %v84 = vtanh.pop %v83
  %v85 = vld [vmem:[%s1 + $0x8] sm:$0xff]
  %v86 = vld [vmem:[%s1 + $0x10] sm:$0xff]
  %v87 = vld [vmem:[%s1 + $0x50] sm:$0xf]
  %vm88 = vcmask 130048
  %v90 = vsel %vm88, %v84, 0
  %92 = vmatpush.msra.mxu0 0.0
  %93 = vmatpush.msra.mxu0 0.0
  %94 = vmatpush.msra.mxu0 0.0
  %95 = vmatpush.msra.mxu0 0.0
  %96 = vmatpush.msra.mxu0 0.0
  %97 = vmatpush.msra.mxu0 0.0
  %98 = vmatpush.msra.mxu0 0.0
  %99 = vmatpush.msra.mxu0 0.0
  %100 = vmatpush.msra.mxu0 0.0
  %101 = vmatpush.msra.mxu0 0.0
  %102 = vmatpush.msra.mxu0 0.0
  %103 = vmatpush.msra.mxu0 0.0
  %104 = vmatpush.msra.mxu0 0.0
  %105 = vmatpush.msra.mxu0 0.0
  %106 = vmatpush.msra.mxu0 %v86
  %107 = vmatpush.msra.mxu0 %v85
  %108 = vmatmul.f32.gmra.mxu0 %v90
  %v109 = vpop.f32.mrf.mxu0
  %v110 = vadd.f32 %v87, %v109
  %111 = vdwg.mxu0
  %v112 = vtanh.pop %v110
  %v113 = vld [vmem:[%s1 + $0x18] sm:$0xff]
  %v114 = vld [vmem:[%s1 + $0x20] sm:$0xff]
  %v115 = vld [vmem:[%s1 + $0x28] sm:$0xff]
  %v116 = vld [vmem:[%s1 + $0x30] sm:$0xff]
  %v117 = vld [vmem:[%s1 + $0x58] sm:$0xf]
  %vm118 = vcmask 261120
  %v120 = vsel %vm118, %v112, 0
  %122 = vmatpush.msra.mxu0 0.0
  %123 = vmatpush.msra.mxu0 0.0
  %124 = vmatpush.msra.mxu0 0.0
  %125 = vmatpush.msra.mxu0 0.0
  %126 = vmatpush.msra.mxu0 0.0
  %127 = vmatpush.msra.mxu0 0.0
  %128 = vmatpush.msra.mxu0 0.0
  %129 = vmatpush.msra.mxu0 0.0
  %130 = vmatpush.msra.mxu0 0.0
  %131 = vmatpush.msra.mxu0 0.0
  %132 = vmatpush.msra.mxu0 0.0
  %133 = vmatpush.msra.mxu0 0.0
  %134 = vmatpush.msra.mxu0 %v116
  %135 = vmatpush.msra.mxu0 %v115
  %136 = vmatpush.msra.mxu0 %v114
  %137 = vmatpush.msra.mxu0 %v113
  %138 = vmatmul.f32.gmra.mxu0 %v120
  %v139 = vpop.f32.mrf.mxu0
  %v140 = vadd.f32 %v117, %v139
  %141 = vdwg.mxu0
  %v142 = vtanh.pop %v140
  %v143 = vld [vmem:[%s1 + $0x38] sm:$0xff]
  %v144 = vld [vmem:[%s1 + $0x40] sm:$0xff]
  %v145 = vld [vmem:[%s1 + $0x60] sm:$0xf]
  %v147 = vsel %vm88, %v142, 0
  %149 = vmatpush.msra.mxu0 0.0
  %150 = vmatpush.msra.mxu0 0.0
  %151 = vmatpush.msra.mxu0 0.0
  %152 = vmatpush.msra.mxu0 0.0
  %153 = vmatpush.msra.mxu0 0.0
  %154 = vmatpush.msra.mxu0 0.0
  %155 = vmatpush.msra.mxu0 0.0
  %156 = vmatpush.msra.mxu0 0.0
  %157 = vmatpush.msra.mxu0 0.0
  %158 = vmatpush.msra.mxu0 0.0
  %159 = vmatpush.msra.mxu0 0.0
  %160 = vmatpush.msra.mxu0 0.0
  %161 = vmatpush.msra.mxu0 0.0
  %162 = vmatpush.msra.mxu0 0.0
  %163 = vmatpush.msra.mxu0 %v144
  %164 = vmatpush.msra.mxu0 %v143
  %165 = vmatmul.f32.gmra.mxu0 %v147
  %v166 = vpop.f32.mrf.mxu0
  %v167 = vadd.f32 %v145, %v166
  %168 = vdwg.mxu0
  %v169 = vtanh.pop %v167
  %v170 = vld [vmem:[%s1 + $0x68] sm:$0xf]
  %v171 = vmul.f32 %v169, %v170
  %vm172 = vcmask 27648
  %v173 = vsel %vm172, %v171, 0.0
  %174 = vadd.xlane.f32.xlu0 %v173
  %v175 = vpop.xlane.xlu0 %174
  %v176 = vld [vmem:[%s1 + $0x70] sm:$0xf]
  %v177 = vadd.f32 %v175, %v176
  %vm178 = vcmask 3072
  %179 = vst.msk [vmem:[%s2] sm:$0xf] %vm178, %v177
  // Predicated region
  $region10: #{network_forward.1} parent=0 // pred_check
    _
  $region11: #{network_forward.1} parent=0 // pred_check_branch
    %181 = sbr.rel (0) target = $region13
  $region12: #{network_forward.1} parent=0 // pred_region
    _
  $region13: #{network_forward.1} parent=0 // pred_fallthru
    _
  // Predicated region
  $region14: #{network_forward.1} parent=0 // pred_check
    _
  $region15: #{network_forward.1} parent=0 // pred_check_branch
    %183 = sbr.rel (0) target = $region17
  $region16: #{network_forward.1} parent=0 // pred_region
    _
  $region17: #{network_forward.1} parent=0 // pred_fallthru
    _

</llo_original>
